<compile_context>
chip_gen: v7x
topology: tpu7x:2x2x1
jax: 0.10.0
libtpu: 0.0.40
codegen_flags: <defaults>
</compile_context>

<pallas_src>
import jax
import jax.numpy as jnp
from jax.experimental import pallas as pl
from jax.experimental.pallas import tpu as pltpu

_LANES = 128
_SUBLANES = 8


def _pack_factor(module_dim):
    """How many batch rows fit in one 128-lane row."""
    if module_dim >= _LANES or _LANES % module_dim != 0:
        return 1
    return _LANES // module_dim


def _choose_tm(bp, tm_max):
    """Packed-batch tile size: big tiles, but >=2 grid steps when bp is large
    so the parallel axis shards across both v7x TensorCores."""
    if bp <= 512:
        return bp  # single full-extent tile (always layout-legal)
    half = -(-bp // 2)
    half = (half + _SUBLANES - 1) // _SUBLANES * _SUBLANES
    return max(min(tm_max, half), _SUBLANES)


def _write_unit_kernel(mem_ref, info_ref, wm_ref, wi_ref, b_ref, o_ref):
    # mem_ref/info_ref: [tm, L]; wm_ref/wi_ref: [L, L] (block-diag W^T);
    # b_ref: [1, L]; o_ref: [tm, L], with L = pack * module_dim.
    acc = jnp.dot(mem_ref[...], wm_ref[...], preferred_element_type=jnp.float32)
    acc = acc + jnp.dot(info_ref[...], wi_ref[...],
                        preferred_element_type=jnp.float32)
    o_ref[...] = (acc + b_ref[...]).astype(o_ref.dtype)


def prepare_write_unit_params(weight, bias, pack):
    """One-time restructuring of the PyTorch-layout params.

    weight: [D, 2D] (out_features, in_features), bias: [D]
    Returns BD(Wm^T), BD(Wi^T) of shape [pack*D, pack*D] and bias tiled to
    [1, pack*D], so that packed_x @ BD(W^T) applies W^T independently to each
    of the `pack` row-segments packed into the 128 lanes.
    """
    D = weight.shape[0]
    assert weight.shape == (D, 2 * D) and bias.shape == (D,)
    wm_t = weight[:, :D].T   # x @ Wm^T
    wi_t = weight[:, D:].T   # x @ Wi^T
    if pack == 1:
        return wm_t, wi_t, bias.reshape(1, D)
    eye = jnp.eye(pack, dtype=weight.dtype)
    wm_bd = jnp.kron(eye, wm_t)              # [pack*D, pack*D] block-diagonal
    wi_bd = jnp.kron(eye, wi_t)
    bias_p = jnp.tile(bias, pack).reshape(1, pack * D)
    return wm_bd, wi_bd, bias_p


def write_unit(memory, info, weight, bias, *, tm_max=4096):
    """memory, info: [B, D]; weight: [D, 2D] (PyTorch layout); bias: [D]."""
    B, D = memory.shape
    assert info.shape == (B, D)
    assert weight.shape == (D, 2 * D)
    assert bias.shape == (D,)
    dtype = memory.dtype

    pack = _pack_factor(D)
    L = pack * D

    wm_bd, wi_bd, bias_p = prepare_write_unit_params(weight, bias, pack)

    # Packed-batch sizing: bp rows of L lanes; pad B so the grid divides evenly.
    bp_raw = pl.cdiv(B, pack)
    tm = _choose_tm(bp_raw, tm_max)
    grid_n = pl.cdiv(bp_raw, tm)
    bp = grid_n * tm
    b_padded = bp * pack
    if b_padded != B:
        pad = b_padded - B
        memory = jnp.pad(memory, ((0, pad), (0, 0)))
        info = jnp.pad(info, ((0, pad), (0, 0)))

    # Row-major contiguous reshape: row 4i+k of [B, D] -> lanes [kD, (k+1)D)
    # of packed row i.  Metadata-level, no HBM shuffle.
    mem_p = memory.reshape(bp, L)
    info_p = info.reshape(bp, L)

    itemsize = jnp.dtype(dtype).itemsize
    cost = pl.CostEstimate(
        flops=2 * 2 * bp * L * L,                       # two dense LxL dots
        transcendentals=0,
        bytes_accessed=(3 * bp * L + 2 * L * L + L) * itemsize,
    )

    out_p = pl.pallas_call(
        _write_unit_kernel,
        out_shape=jax.ShapeDtypeStruct((bp, L), dtype),
        grid_spec=pltpu.PrefetchScalarGridSpec(
            num_scalar_prefetch=0,
            grid=(grid_n,),
            in_specs=[
                pl.BlockSpec((tm, L), lambda i: (i, 0)),    # packed memory tile
                pl.BlockSpec((tm, L), lambda i: (i, 0)),    # packed info tile
                pl.BlockSpec((L, L), lambda i: (0, 0)),     # BD(Wm^T), VMEM-resident
                pl.BlockSpec((L, L), lambda i: (0, 0)),     # BD(Wi^T), VMEM-resident
                pl.BlockSpec((1, L), lambda i: (0, 0)),     # packed bias
            ],
            out_specs=pl.BlockSpec((tm, L), lambda i: (i, 0)),
        ),
        compiler_params=pltpu.CompilerParams(
            dimension_semantics=("parallel",),
            vmem_limit_bytes=32 * 1024 * 1024,
        ),
        cost_estimate=cost,
    )(mem_p, info_p, wm_bd, wi_bd, bias_p)

    out = out_p.reshape(b_padded, D)
    if b_padded != B:
        out = out[:B]
    return out


def init_write_unit_params(key, module_dim, dtype=jnp.float32):
    """Deterministic init mirroring nn.Linear(module_dim*2, module_dim)."""
    in_features = module_dim * 2
    k_w, k_b = jax.random.split(key)
    bound = 1.0 / float(in_features) ** 0.5
    weight = jax.random.uniform(
        k_w, (module_dim, in_features), dtype=dtype, minval=-bound, maxval=bound
    )
    bias = jax.random.uniform(
        k_b, (module_dim,), dtype=dtype, minval=-bound, maxval=bound
    )
    return weight, bias


def _reference(memory, info, weight, bias):
    return jnp.concatenate([memory, info], axis=-1) @ weight.T + bias


if __name__ == "__main__":
    key = jax.random.PRNGKey(0)
    k_mem, k_info, k_param = jax.random.split(key, 3)

    module_dim = 32
    weight, bias = init_write_unit_params(k_param, module_dim)

    ok = True
    for batch in (8, 10, 4096):  # small / ragged-pad / multi-tile grid
        memory = jax.random.normal(k_mem, (batch, module_dim), dtype=jnp.float32)
        info = jax.random.normal(k_info, (batch, module_dim), dtype=jnp.float32)
        out = write_unit(memory, info, weight, bias)
        jax.block_until_ready(out)
        ref = _reference(memory, info, weight, bias)
        ok = ok and (out.shape == (batch, module_dim))
        ok = ok and bool(jnp.allclose(out, ref, atol=1e-5, rtol=1e-5))

    assert ok
    print("KERNEL_OK")
</pallas_src>

<mosaic_0001>
module attributes {stable_mosaic.version = 11 : i64} {
  func.func @_write_unit_kernel(%arg0: i32, %arg1: memref<2x128xf32, #tpu.memory_space<vmem>>, %arg2: memref<2x128xf32, #tpu.memory_space<vmem>>, %arg3: memref<128x128xf32, #tpu.memory_space<vmem>>, %arg4: memref<128x128xf32, #tpu.memory_space<vmem>>, %arg5: memref<1x128xf32, #tpu.memory_space<vmem>>, %arg6: memref<2x128xf32, #tpu.memory_space<vmem>>) attributes {dimension_semantics = [#tpu.dimension_semantics<parallel>], iteration_bounds = array<i64: 1>, scalar_prefetch = 0 : i64, scratch_operands = 0 : i64, tpu.core_type = #tpu.core_type<tc>, window_params = [{transform_indices = @transform_0, window_bounds = array<i64: 2, 128>}, {transform_indices = @transform_1, window_bounds = array<i64: 2, 128>}, {pipeline_mode = #tpu.pipeline_mode<synchronous>, transform_indices = @transform_2, window_bounds = array<i64: 128, 128>}, {pipeline_mode = #tpu.pipeline_mode<synchronous>, transform_indices = @transform_3, window_bounds = array<i64: 128, 128>}, {pipeline_mode = #tpu.pipeline_mode<synchronous>, transform_indices = @transform_4, window_bounds = array<i64: 1, 128>}, {transform_indices = @transform_5, window_bounds = array<i64: 2, 128>}]} {
    %c0 = arith.constant 0 : index
    %c0_0 = arith.constant 0 : index
    %0 = vector.load %arg1[%c0, %c0_0] : memref<2x128xf32, #tpu.memory_space<vmem>>, vector<2x128xf32>
    %c0_1 = arith.constant 0 : index
    %c0_2 = arith.constant 0 : index
    %1 = vector.load %arg3[%c0_1, %c0_2] : memref<128x128xf32, #tpu.memory_space<vmem>>, vector<128x128xf32>
    %cst = arith.constant dense<0.000000e+00> : vector<2x128xf32>
    %2 = tpu.matmul %0, %1, %cst {dimension_numbers = #tpu.dot_dimension_numbers<[1], [0], [0], [1], [0, 0, 1, 1], [], []>} : vector<2x128xf32>, vector<128x128xf32>, vector<2x128xf32> -> vector<2x128xf32>
    %c0_3 = arith.constant 0 : index
    %c0_4 = arith.constant 0 : index
    %3 = vector.load %arg2[%c0_3, %c0_4] : memref<2x128xf32, #tpu.memory_space<vmem>>, vector<2x128xf32>
    %c0_5 = arith.constant 0 : index
    %c0_6 = arith.constant 0 : index
    %4 = vector.load %arg4[%c0_5, %c0_6] : memref<128x128xf32, #tpu.memory_space<vmem>>, vector<128x128xf32>
    %cst_7 = arith.constant dense<0.000000e+00> : vector<2x128xf32>
    %5 = tpu.matmul %3, %4, %cst_7 {dimension_numbers = #tpu.dot_dimension_numbers<[1], [0], [0], [1], [0, 0, 1, 1], [], []>} : vector<2x128xf32>, vector<128x128xf32>, vector<2x128xf32> -> vector<2x128xf32>
    %6 = arith.addf %2, %5 : vector<2x128xf32>
    %c0_8 = arith.constant 0 : index
    %c0_9 = arith.constant 0 : index
    %7 = vector.load %arg5[%c0_8, %c0_9] : memref<1x128xf32, #tpu.memory_space<vmem>>, vector<1x128xf32>
    %8 = vector.broadcast %7 : vector<1x128xf32> to vector<2x128xf32>
    %9 = arith.addf %6, %8 : vector<2x128xf32>
    %c0_10 = arith.constant 0 : index
    %c0_11 = arith.constant 0 : index
    %10 = vector.load %arg6[%c0_10, %c0_11] : memref<2x128xf32, #tpu.memory_space<vmem>>, vector<2x128xf32>
    tpu.vector_store %arg6[%c0_10, %c0_11], %9 {strides = array<i32>} : memref<2x128xf32, #tpu.memory_space<vmem>>, vector<2x128xf32>,
    return
  }
  func.func @transform_0(%arg0: i32) -> (i32, i32) {
    %c0_i32 = arith.constant 0 : i32
    %c0_i32_0 = arith.constant 0 : i32
    return %arg0, %c0_i32 : i32, i32
  }
  func.func @transform_1(%arg0: i32) -> (i32, i32) {
    %c0_i32 = arith.constant 0 : i32
    %c0_i32_0 = arith.constant 0 : i32
    return %arg0, %c0_i32 : i32, i32
  }
  func.func @transform_2(%arg0: i32) -> (i32, i32) {
    %c0_i32 = arith.constant 0 : i32
    %c0_i32_0 = arith.constant 0 : i32
    %c0_i32_1 = arith.constant 0 : i32
    return %c0_i32, %c0_i32_0 : i32, i32
  }
  func.func @transform_3(%arg0: i32) -> (i32, i32) {
    %c0_i32 = arith.constant 0 : i32
    %c0_i32_0 = arith.constant 0 : i32
    %c0_i32_1 = arith.constant 0 : i32
    return %c0_i32, %c0_i32_0 : i32, i32
  }
  func.func @transform_4(%arg0: i32) -> (i32, i32) {
    %c0_i32 = arith.constant 0 : i32
    %c0_i32_0 = arith.constant 0 : i32
    %c0_i32_1 = arith.constant 0 : i32
    return %c0_i32, %c0_i32_0 : i32, i32
  }
  func.func @transform_5(%arg0: i32) -> (i32, i32) {
    %c0_i32 = arith.constant 0 : i32
    %c0_i32_0 = arith.constant 0 : i32
    return %arg0, %c0_i32 : i32, i32
  }
}

</mosaic_0001>

<llo_original>
// kernel: tpu_custom_call.1
$region0: #{tpu_custom_call.1}
  #allocation0 [shape = 'u32[]', space=smem, size = 0x4, offset = 0x4, fixed_abs, tag = 'smem constant byte address 0x4 - core index']
  #allocation1 [shape = 'u32[144,128]{1,0:T(1,128)}', space=vmem, size = 0x12000, scoped, tag = 'internal scratch']
  %s0 = inlined_call_operand.hbm [shape: f32[2,128], index: 0, kind: input, shape index: {}]
  %s1 = inlined_call_operand.vmem [shape: f32[2,128], index: 1, kind: input, shape index: {}]
  %s2 = inlined_call_operand.hbm [shape: f32[128,128], index: 2, kind: input, shape index: {}]
  %s3 = inlined_call_operand.hbm [shape: f32[128,128], index: 3, kind: input, shape index: {}]
  %s4 = inlined_call_operand.vmem [shape: f32[1,128], index: 4, kind: input, shape index: {}]
  %s5 = inlined_call_operand.hbm [shape: f32[2,128], index: 5, kind: output, shape index: {}]
  %s6 = sld [smem:[#allocation0]]
  $region42: #{tpu_custom_call.1} parent=0
    _
  %s8 = ssub.s32 1, %s6
  %s9 = scalar_select 0, %s8, %s6
  $region1: #{tpu_custom_call.1} parent=0
    #allocation2 [shape = 'u8[1024]{0}', space=vmem, size = 0x400, scoped, tag = 'input window, operand 0, single buffered']
    #allocation3 [shape = 's32[1]{0}', space=sflag, size = 0x4, scoped, tag = 'scoped memory for tpu_custom_call.1']
    #allocation4 [shape = 's32[1]{0}', space=sflag, size = 0x4, scoped, tag = 'scoped memory for tpu_custom_call.1']
    #allocation5 [shape = 'u8[65536]{0}', space=vmem, size = 0x10000, scoped, tag = 'input window, operand 2, single buffered']
    #allocation6 [shape = 's32[1]{0}', space=sflag, size = 0x4, scoped, tag = 'scoped memory for tpu_custom_call.1']
    #allocation7 [shape = 'u8[65536]{0}', space=vmem, size = 0x10000, scoped, tag = 'input window, operand 3, single buffered']
    #allocation8 [shape = 'u8[1024]{0}', space=vmem, size = 0x400, scoped, tag = 'output window, operand 0, single buffered']
    %10 = vsyncpa [#allocation3], 0
    %11 = vsyncpa [#allocation6], 0
    %12 = vsyncpa [#allocation4], 0
    // Predicated region
    $region2: #{tpu_custom_call.1} parent=1 // pred_check
      _
    $region3: #{tpu_custom_call.1} parent=1 // pred_check_branch
      %14 = sbr.rel (0) target = $region5
    $region4: #{tpu_custom_call.1} parent=1 // pred_region
      %s16 = ssub.s32 32, 32
      %17 = vsyncadd [#allocation3], %s16
      %s19 = sshll.u32 [#allocation2], 4
      %s20 = int_to_ptr.vmem [resolvable:$true] %s19
      %22 = dma.hbm_to_vmem [thread:$0]  %s0, 32, %s20, [#allocation3]
    $region5: #{tpu_custom_call.1} parent=1 // pred_fallthru
      _
    // Predicated region
    $region6: #{tpu_custom_call.1} parent=1 // pred_check
      _
    $region7: #{tpu_custom_call.1} parent=1 // pred_check_branch
      %24 = sbr.rel (0) target = $region9
    $region8: #{tpu_custom_call.1} parent=1 // pred_region
      _
    $region9: #{tpu_custom_call.1} parent=1 // pred_fallthru
      _
    // Predicated region
    $region10: #{tpu_custom_call.1} parent=1 // pred_check
      _
    $region11: #{tpu_custom_call.1} parent=1 // pred_check_branch
      %26 = sbr.rel (0) target = $region13
    $region12: #{tpu_custom_call.1} parent=1 // pred_region
      %s28 = ssub.s32 2048, 2048
      %29 = vsyncadd [#allocation6], %s28
      %s30 = sshll.u32 [#allocation5], 4
      %s31 = int_to_ptr.vmem [resolvable:$true] %s30
      %36 = dma.hbm_to_vmem [thread:$0]  %s2, 2048, %s31, [#allocation6], 128, 128, 8
    $region13: #{tpu_custom_call.1} parent=1 // pred_fallthru
      _
    // Predicated region
    $region14: #{tpu_custom_call.1} parent=1 // pred_check
      _
    $region15: #{tpu_custom_call.1} parent=1 // pred_check_branch
      %38 = sbr.rel (0) target = $region17
    $region16: #{tpu_custom_call.1} parent=1 // pred_region
      %s40 = ssub.s32 2048, 2048
      %41 = vsyncadd [#allocation6], %s40
      %s42 = sshll.u32 [#allocation7], 4
      %s43 = int_to_ptr.vmem [resolvable:$true] %s42
      %48 = dma.hbm_to_vmem [thread:$0]  %s3, 2048, %s43, [#allocation6], 128, 128, 8
    $region17: #{tpu_custom_call.1} parent=1 // pred_fallthru
      _
    // Predicated region
    $region18: #{tpu_custom_call.1} parent=1 // pred_check
      _
    $region19: #{tpu_custom_call.1} parent=1 // pred_check_branch
      %50 = sbr.rel (0) target = $region21
    $region20: #{tpu_custom_call.1} parent=1 // pred_region
      _
    $region21: #{tpu_custom_call.1} parent=1 // pred_fallthru
      _
    // Predicated region
    $region22: #{tpu_custom_call.1} parent=1 // pred_check
      _
    $region23: #{tpu_custom_call.1} parent=1 // pred_check_branch
      %52 = sbr.rel (0) target = $region25
    $region24: #{tpu_custom_call.1} parent=1 // pred_region
      %53 = dma.done [#allocation3], 32
    $region25: #{tpu_custom_call.1} parent=1 // pred_fallthru
      _
    // Predicated region
    $region26: #{tpu_custom_call.1} parent=1 // pred_check
      _
    $region27: #{tpu_custom_call.1} parent=1 // pred_check_branch
      %55 = sbr.rel (0) target = $region29
    $region28: #{tpu_custom_call.1} parent=1 // pred_region
      %56 = dma.done [#allocation6], 2048
    $region29: #{tpu_custom_call.1} parent=1 // pred_fallthru
      _
    // Predicated region
    $region30: #{tpu_custom_call.1} parent=1 // pred_check
      _
    $region31: #{tpu_custom_call.1} parent=1 // pred_check_branch
      %58 = sbr.rel (0) target = $region33
    $region32: #{tpu_custom_call.1} parent=1 // pred_region
      %59 = dma.done [#allocation6], 2048
    $region33: #{tpu_custom_call.1} parent=1 // pred_fallthru
      _
    %v60 = vld [vmem:[#allocation2] sm:$0x3]
    %v61 = vld [vmem:[#allocation5] sm:$0xff]
    %v62 = vld [vmem:[#allocation5 + $0x8] sm:$0xff]
    %v63 = vld [vmem:[#allocation5 + $0x10] sm:$0xff]
    %v64 = vld [vmem:[#allocation5 + $0x18] sm:$0xff]
    %v65 = vld [vmem:[#allocation5 + $0x20] sm:$0xff]
    %v66 = vld [vmem:[#allocation5 + $0x28] sm:$0xff]
    %v67 = vld [vmem:[#allocation5 + $0x30] sm:$0xff]
    %v68 = vld [vmem:[#allocation5 + $0x38] sm:$0xff]
    %v69 = vld [vmem:[#allocation5 + $0x40] sm:$0xff]
    %v70 = vld [vmem:[#allocation5 + $0x48] sm:$0xff]
    %v71 = vld [vmem:[#allocation5 + $0x50] sm:$0xff]
    %v72 = vld [vmem:[#allocation5 + $0x58] sm:$0xff]
    %v73 = vld [vmem:[#allocation5 + $0x60] sm:$0xff]
    %v74 = vld [vmem:[#allocation5 + $0x68] sm:$0xff]
    %v75 = vld [vmem:[#allocation5 + $0x70] sm:$0xff]
    %v76 = vld [vmem:[#allocation5 + $0x78] sm:$0xff]
    %v77 = vld [vmem:[%s1] sm:$0x3]
    %v78 = vld [vmem:[#allocation7] sm:$0xff]
    %v79 = vld [vmem:[#allocation7 + $0x8] sm:$0xff]
    %v80 = vld [vmem:[#allocation7 + $0x10] sm:$0xff]
    %v81 = vld [vmem:[#allocation7 + $0x18] sm:$0xff]
    %v82 = vld [vmem:[#allocation7 + $0x20] sm:$0xff]
    %v83 = vld [vmem:[#allocation7 + $0x28] sm:$0xff]
    %v84 = vld [vmem:[#allocation7 + $0x30] sm:$0xff]
    %v85 = vld [vmem:[#allocation7 + $0x38] sm:$0xff]
    %v86 = vld [vmem:[#allocation7 + $0x40] sm:$0xff]
    %v87 = vld [vmem:[#allocation7 + $0x48] sm:$0xff]
    %v88 = vld [vmem:[#allocation7 + $0x50] sm:$0xff]
    %v89 = vld [vmem:[#allocation7 + $0x58] sm:$0xff]
    %v90 = vld [vmem:[#allocation7 + $0x60] sm:$0xff]
    %v91 = vld [vmem:[#allocation7 + $0x68] sm:$0xff]
    %v92 = vld [vmem:[#allocation7 + $0x70] sm:$0xff]
    %v93 = vld [vmem:[#allocation7 + $0x78] sm:$0xff]
    %94 = vmatprep.subr.mxu0 0.0
    %95 = vmatpush1.msra.mxu0 %v78
    %96 = vmatprep.subr.mxu0 0.0
    %97 = vmatpush1.msra.mxu0 %v79
    %98 = vmatprep.subr.mxu0 0.0
    %99 = vmatpush1.msra.mxu0 %v80
    %100 = vmatprep.subr.mxu0 0.0
    %101 = vmatpush1.msra.mxu0 %v81
    %102 = vmatprep.subr.mxu0 0.0
    %103 = vmatpush1.msra.mxu0 %v82
    %104 = vmatprep.subr.mxu0 0.0
    %105 = vmatpush1.msra.mxu0 %v83
    %106 = vmatprep.subr.mxu0 0.0
    %107 = vmatpush1.msra.mxu0 %v84
    %108 = vmatprep.subr.mxu0 0.0
    %109 = vmatpush1.msra.mxu0 %v85
    %110 = vmatprep.subr.mxu0 0.0
    %111 = vmatpush1.msra.mxu0 %v86
    %112 = vmatprep.subr.mxu0 0.0
    %113 = vmatpush1.msra.mxu0 %v87
    %114 = vmatprep.subr.mxu0 0.0
    %115 = vmatpush1.msra.mxu0 %v88
    %116 = vmatprep.subr.mxu0 0.0
    %117 = vmatpush1.msra.mxu0 %v89
    %118 = vmatprep.subr.mxu0 0.0
    %119 = vmatpush1.msra.mxu0 %v90
    %120 = vmatprep.subr.mxu0 0.0
    %121 = vmatpush1.msra.mxu0 %v91
    %122 = vmatprep.subr.mxu0 0.0
    %123 = vmatpush1.msra.mxu0 %v92
    %124 = vmatprep.subr.mxu0 0.0
    %125 = vmatpush1.msra.mxu0 %v93
    %126 = vmatprep.subr.mxu0 0.0
    %127 = vmatpush1.msra.mxu0 0.0
    %128 = vmatprep.subr.mxu0 0.0
    %129 = vmatpush1.msra.mxu0 0.0
    %130 = vmatprep.subr.mxu0 0.0
    %131 = vmatpush1.msra.mxu0 0.0
    %132 = vmatprep.subr.mxu0 0.0
    %133 = vmatpush1.msra.mxu0 0.0
    %134 = vmatprep.subr.mxu0 0.0
    %135 = vmatpush1.msra.mxu0 0.0
    %136 = vmatprep.subr.mxu0 0.0
    %137 = vmatpush1.msra.mxu0 0.0
    %138 = vmatprep.subr.mxu0 0.0
    %139 = vmatpush1.msra.mxu0 0.0
    %140 = vmatprep.subr.mxu0 0.0
    %141 = vmatpush1.msra.mxu0 0.0
    %142 = vmatprep.subr.mxu0 0.0
    %143 = vmatpush1.msra.mxu0 0.0
    %144 = vmatprep.subr.mxu0 0.0
    %145 = vmatpush1.msra.mxu0 0.0
    %146 = vmatprep.subr.mxu0 0.0
    %147 = vmatpush1.msra.mxu0 0.0
    %148 = vmatprep.subr.mxu0 0.0
    %149 = vmatpush1.msra.mxu0 0.0
    %150 = vmatprep.subr.mxu0 0.0
    %151 = vmatpush1.msra.mxu0 0.0
    %152 = vmatprep.subr.mxu0 0.0
    %153 = vmatpush1.msra.mxu0 0.0
    %154 = vmatprep.subr.mxu0 0.0
    %155 = vmatpush1.msra.mxu0 0.0
    %156 = vmatprep.subr.mxu0 0.0
    %157 = vmatpush1.msra.mxu0 0.0
    %158 = vmatprep.mubr.f32.mxu0 0.0
    %159 = vmatmul.mubr.f32.gmra.mrb[0].mxu0 %v77
    %v160 = vpop.f32.mrb[0].mxu0
    %v161 = vadd.f32 0.0, %v160
    %v162 = vpop.f32.mrb[0].mxu0
    %163 = vdwg.mxu0
    %164 = vmatprep.subr.mxu0 0.0
    %165 = vmatpush1.msra.mxu0 %v61
    %166 = vmatprep.subr.mxu0 0.0
    %167 = vmatpush1.msra.mxu0 %v62
    %168 = vmatprep.subr.mxu0 0.0
    %169 = vmatpush1.msra.mxu0 %v63
    %170 = vmatprep.subr.mxu0 0.0
    %171 = vmatpush1.msra.mxu0 %v64
    %172 = vmatprep.subr.mxu0 0.0
    %173 = vmatpush1.msra.mxu0 %v65
    %174 = vmatprep.subr.mxu0 0.0
    %175 = vmatpush1.msra.mxu0 %v66
    %176 = vmatprep.subr.mxu0 0.0
    %177 = vmatpush1.msra.mxu0 %v67
    %178 = vmatprep.subr.mxu0 0.0
    %179 = vmatpush1.msra.mxu0 %v68
    %180 = vmatprep.subr.mxu0 0.0
    %181 = vmatpush1.msra.mxu0 %v69
    %182 = vmatprep.subr.mxu0 0.0
    %183 = vmatpush1.msra.mxu0 %v70
    %184 = vmatprep.subr.mxu0 0.0
    %185 = vmatpush1.msra.mxu0 %v71
    %186 = vmatprep.subr.mxu0 0.0
    %187 = vmatpush1.msra.mxu0 %v72
    %188 = vmatprep.subr.mxu0 0.0
    %189 = vmatpush1.msra.mxu0 %v73
    %190 = vmatprep.subr.mxu0 0.0
    %191 = vmatpush1.msra.mxu0 %v74
    %192 = vmatprep.subr.mxu0 0.0
    %193 = vmatpush1.msra.mxu0 %v75
    %194 = vmatprep.subr.mxu0 0.0
    %195 = vmatpush1.msra.mxu0 %v76
    %196 = vmatprep.subr.mxu0 0.0
    %197 = vmatpush1.msra.mxu0 0.0
    %198 = vmatprep.subr.mxu0 0.0
    %199 = vmatpush1.msra.mxu0 0.0
    %200 = vmatprep.subr.mxu0 0.0
    %201 = vmatpush1.msra.mxu0 0.0
    %202 = vmatprep.subr.mxu0 0.0
    %203 = vmatpush1.msra.mxu0 0.0
    %204 = vmatprep.subr.mxu0 0.0
    %205 = vmatpush1.msra.mxu0 0.0
    %206 = vmatprep.subr.mxu0 0.0
    %207 = vmatpush1.msra.mxu0 0.0
    %208 = vmatprep.subr.mxu0 0.0
    %209 = vmatpush1.msra.mxu0 0.0
    %210 = vmatprep.subr.mxu0 0.0
    %211 = vmatpush1.msra.mxu0 0.0
    %212 = vmatprep.subr.mxu0 0.0
    %213 = vmatpush1.msra.mxu0 0.0
    %214 = vmatprep.subr.mxu0 0.0
    %215 = vmatpush1.msra.mxu0 0.0
    %216 = vmatprep.subr.mxu0 0.0
    %217 = vmatpush1.msra.mxu0 0.0
    %218 = vmatprep.subr.mxu0 0.0
    %219 = vmatpush1.msra.mxu0 0.0
    %220 = vmatprep.subr.mxu0 0.0
    %221 = vmatpush1.msra.mxu0 0.0
    %222 = vmatprep.subr.mxu0 0.0
    %223 = vmatpush1.msra.mxu0 0.0
    %224 = vmatprep.subr.mxu0 0.0
    %225 = vmatpush1.msra.mxu0 0.0
    %226 = vmatprep.subr.mxu0 0.0
    %227 = vmatpush1.msra.mxu0 0.0
    %228 = vmatprep.mubr.f32.mxu0 0.0
    %229 = vmatmul.mubr.f32.gmra.mrb[0].mxu0 %v60
    %v230 = vpop.f32.mrb[0].mxu0
    %v231 = vadd.f32 %v161, %v230
    %v232 = vpop.f32.mrb[0].mxu0
    %233 = vdwg.mxu0
    %v234 = vld [vmem:[%s4] sm:$0x1]
    %v236 = vlaneseq
    %v237 = vshrl.u32 %v236, 7
    %v238 = vsub.s32 0, %v237
    %v239 = vrot.slane %v234, %v238
    %v241 = vadd.f32 %v231, %v239
    %242 = vst [vmem:[#allocation8] sm:$0x3] %v241
    // Predicated region
    $region34: #{tpu_custom_call.1} parent=1 // pred_check
      _
    $region35: #{tpu_custom_call.1} parent=1 // pred_check_branch
      %244 = sbr.rel (0) target = $region37
    $region36: #{tpu_custom_call.1} parent=1 // pred_region
      %s246 = ssub.s32 32, 32
      %247 = vsyncadd [#allocation4], %s246
      %s249 = sshll.u32 [#allocation8], 4
      %s250 = int_to_ptr.vmem [resolvable:$true] %s249
      %252 = dma.vmem_to_hbm [thread:$0]  %s250, 32, %s5, [#allocation4]
    $region37: #{tpu_custom_call.1} parent=1 // pred_fallthru
      _
    // Predicated region
    $region38: #{tpu_custom_call.1} parent=1 // pred_check
      _
    $region39: #{tpu_custom_call.1} parent=1 // pred_check_branch
      %254 = sbr.rel (0) target = $region41
    $region40: #{tpu_custom_call.1} parent=1 // pred_region
      %255 = dma.done [#allocation4], 32
    $region41: #{tpu_custom_call.1} parent=1 // pred_fallthru
      _
    %256 = vsyncpa [#allocation3], 1
    %257 = vsyncpa [#allocation6], 1
    %258 = vsyncpa [#allocation4], 1

</llo_original>
